<compile_context>
chip_gen: v5e
topology: v5e:2x2
jax: 0.10.0
libtpu: 0.0.40
codegen_flags: <defaults>
</compile_context>

<pallas_src>
import functools

import jax
import jax.numpy as jnp
from jax import lax
from jax.experimental import pallas as pl
from jax.experimental.pallas import tpu as pltpu


def _round_up(x, m):
    return ((x + m - 1) // m) * m


def _tpu_vmem_capacity_bytes():
    try:
        return int(pltpu.get_tpu_info().vmem_capacity_bytes)
    except Exception:
        return 64 * 1024 * 1024  # conservative default (v7x per-TC VMEM)


def _default_tile_params():
    try:
        kind = jax.devices()[0].device_kind.lower()
    except Exception:
        kind = ""
    if "v5" in kind:
        # v5e: 128x128 MXUs, single vector-store slot -> smaller live intermediate.
        return 128, 256
    if "v6" in kind:
        # v6e: 256x256 MXU, 128 MiB VMEM -> bigger token tile amortizes per-step overhead.
        return 512, 512
    # v7x (64 MiB VMEM, 2 TCs) and anything unknown.
    return 256, 512


def _pick_ff_chunk(ff_dim, preferred):
    # Largest "nice" chunk that divides ff_dim; fall back to the full ff_dim.
    for c in (preferred, 1024, 512, 384, 256, 128):
        if 0 < c <= ff_dim and ff_dim % c == 0:
            return c
    return ff_dim


def _ffn_kernel(x_ref, w1_ref, b1_ref, w2_ref, b2_ref, o_ref, *,
                gelu_type, ff_chunk):
    # x_ref : (TM, dim)      current token tile (pipelined HBM->VMEM)
    # w1_ref: (dim, ff_dim)  fc1 weight, pre-transposed, resident in VMEM
    # b1_ref: (1, ff_dim)
    # w2_ref: (ff_dim, dim)  fc2 weight, pre-transposed, resident in VMEM
    # b2_ref: (1, dim)
    # o_ref : (TM, dim)
    x = x_ref[...]
    tm = x.shape[0]
    dim = o_ref.shape[-1]
    ff_dim = w1_ref.shape[-1]
    n_chunks = ff_dim // ff_chunk

    # f32 accumulator initialized with the fc2 bias (broadcast hoisted out of the loop).
    acc0 = jnp.broadcast_to(b2_ref[...].astype(jnp.float32), (tm, dim))

    def chunk_step(off, acc):
        w1c = w1_ref[:, pl.ds(off, ff_chunk)]                      # (dim, FC)
        h = jnp.dot(x, w1c, preferred_element_type=jnp.float32)    # (TM, FC) f32
        h = h + b1_ref[:, pl.ds(off, ff_chunk)].astype(jnp.float32)
        if gelu_type == 'exact':
            # matches torch.nn.functional.gelu (erf-based, exact)
            h = 0.5 * h * (1.0 + lax.erf(h * 0.7071067811865475))
        else:
            # quick gelu: x * sigmoid(1.702 * x)
            h = h * jax.nn.sigmoid(1.702 * h)
        # TODO(synk): on v6e/v7x the GELU/VPU work could run in bf16 to halve VALU
        # slots; kept in f32 to match the fp32 torch reference exactly.
        h = h.astype(w2_ref.dtype)
        w2c = w2_ref[pl.ds(off, ff_chunk), :]                      # (FC, dim)
        return acc + jnp.dot(h, w2c, preferred_element_type=jnp.float32)

    if n_chunks == 1:
        acc = chunk_step(0, acc0)
    else:
        acc = lax.fori_loop(
            0, n_chunks,
            lambda c, a: chunk_step(pl.multiple_of(c * ff_chunk, ff_chunk), a),
            acc0,
            unroll=(n_chunks <= 8))

    o_ref[...] = acc.astype(o_ref.dtype)


def position_wise_feed_forward(x, w1, b1, w2, b2, gelu_type='exact',
                               tm=None, ff_chunk=None):
    """x: (B, S, dim); w1: (ff_dim, dim); b1: (ff_dim,); w2: (dim, ff_dim); b2: (dim,).

    Weights/biases are accepted in torch nn.Linear layout; a single cheap XLA
    transpose per call puts them in standard contraction layout for the kernel.
    """
    assert gelu_type in ('exact', 'quick')
    B, S, dim = x.shape
    ff_dim, dim_w = w1.shape
    assert dim_w == dim and w2.shape == (dim, ff_dim)
    assert b1.shape == (ff_dim,) and b2.shape == (dim,)
    M = B * S

    tm_default, fc_default = _default_tile_params()
    if tm is None:
        tm = tm_default
    if ff_chunk is None:
        ff_chunk = fc_default
    FC = _pick_ff_chunk(ff_dim, ff_chunk)

    # Pre-transpose weights once (amortized over all tokens): standard layout
    # avoids any per-grid-step relayout of the resident weights in the kernel.
    w1t = jnp.transpose(w1)          # (dim, ff_dim)
    w2t = jnp.transpose(w2)          # (ff_dim, dim)
    b1_2d = b1.reshape(1, ff_dim)
    b2_2d = b2.reshape(1, dim)

    x2d = x.reshape(M, dim)
    M_pad8 = _round_up(M, 8)
    TM = _round_up(min(tm, M_pad8), 8)

    # ---- VMEM budgeting (capacity-aware; weights single-buffered) ----
    cap = int(0.85 * _tpu_vmem_capacity_bytes())

    def _estimate(tm_, fc_):
        w_bytes = (2 * dim * ff_dim + dim + ff_dim) * w1.dtype.itemsize   # resident, 1x
        io_bytes = 2 * 2 * tm_ * dim * x.dtype.itemsize                   # x & out, double-buffered
        acc_bytes = tm_ * dim * 4                                         # f32 accumulator
        h_bytes = 3 * tm_ * fc_ * 4                                       # f32 chunk intermediate + slack
        return w_bytes + io_bytes + acc_bytes + h_bytes + (1 << 20)

    while _estimate(TM, FC) > cap and TM > 8:
        TM = max(8, _round_up(TM // 2, 8))
    # TODO(synk): if the resident weights alone exceed the VMEM cap (huge ff_dim
    # on v7x), add an ff_dim grid axis with an f32 accumulator scratch instead
    # of keeping the weights fully resident.

    # Guarantee >= 2 grid steps so the 'parallel' M axis can shard across the
    # two TensorCores on v7x (neutral on single-TC v5e/v6e).
    if M_pad8 >= 16 and pl.cdiv(M_pad8, TM) < 2:
        TM = _round_up(pl.cdiv(M_pad8, 2), 8)

    M_pad = _round_up(M, TM)
    if M_pad != M:
        x2d = jnp.pad(x2d, ((0, M_pad - M), (0, 0)))

    vmem_limit = int(min(max(2 * _estimate(TM, FC), 32 * 1024 * 1024), cap))

    kernel = functools.partial(_ffn_kernel, gelu_type=gelu_type, ff_chunk=FC)

    def _build(single_buffer_weights):
        wkw = {}
        if single_buffer_weights:
            # Constant index_map -> weights stay resident and are never re-DMA'd;
            # single-buffer them to halve their VMEM footprint.
            wkw = dict(pipeline_mode=pl.Buffered(buffer_count=1))
        return pl.pallas_call(
            kernel,
            out_shape=jax.ShapeDtypeStruct((M_pad, dim), x.dtype),
            grid=(M_pad // TM,),
            in_specs=[
                pl.BlockSpec((TM, dim), lambda i: (i, 0)),               # x tile (pipelined)
                pl.BlockSpec((dim, ff_dim), lambda i: (0, 0), **wkw),    # w1t (resident)
                pl.BlockSpec((1, ff_dim), lambda i: (0, 0), **wkw),      # b1  (resident)
                pl.BlockSpec((ff_dim, dim), lambda i: (0, 0), **wkw),    # w2t (resident)
                pl.BlockSpec((1, dim), lambda i: (0, 0), **wkw),         # b2  (resident)
            ],
            out_specs=pl.BlockSpec((TM, dim), lambda i: (i, 0)),
            compiler_params=pltpu.CompilerParams(
                dimension_semantics=("parallel",),
                vmem_limit_bytes=vmem_limit),
        )

    use_sb = hasattr(pl, "Buffered")
    try:
        out2d = _build(use_sb)(x2d, w1t, b1_2d, w2t, b2_2d)
    except Exception:
        if not use_sb:
            raise
        # Fallback: default double-buffered weight blocks.
        out2d = _build(False)(x2d, w1t, b1_2d, w2t, b2_2d)

    if M_pad != M:
        out2d = out2d[:M]
    return out2d.reshape(B, S, dim)


def _reference(x, w1, b1, w2, b2, gelu_type):
    h = x @ w1.T + b1
    if gelu_type == 'exact':
        h = jax.nn.gelu(h, approximate=False)
    else:
        h = h * jax.nn.sigmoid(1.702 * h)
    return h @ w2.T + b2


if __name__ == "__main__":
    key = jax.random.PRNGKey(0)

    def make_inputs(key, B, S, dim, ff_dim):
        kx, kw1, kb1, kw2, kb2 = jax.random.split(key, 5)
        x = jax.random.normal(kx, (B, S, dim), dtype=jnp.float32)
        # nn.Linear(dim, ff_dim): weight (ff_dim, dim), bias (ff_dim,)
        w1 = jax.random.normal(kw1, (ff_dim, dim), dtype=jnp.float32) * 0.05
        b1 = jax.random.normal(kb1, (ff_dim,), dtype=jnp.float32) * 0.05
        # nn.Linear(ff_dim, dim): weight (dim, ff_dim), bias (dim,)
        w2 = jax.random.normal(kw2, (dim, ff_dim), dtype=jnp.float32) * 0.05
        b2 = jax.random.normal(kb2, (dim,), dtype=jnp.float32) * 0.05
        return x, w1, b1, w2, b2

    k1, k2, k3 = jax.random.split(key, 3)

    # Case 1: exact GELU, M a clean multiple of 8 (2-step grid, single FF chunk).
    x, w1, b1, w2, b2 = make_inputs(k1, B=2, S=8, dim=32, ff_dim=64)
    out = jax.block_until_ready(
        position_wise_feed_forward(x, w1, b1, w2, b2, gelu_type='exact'))
    ref = _reference(x, w1, b1, w2, b2, 'exact')
    assert out.shape == x.shape
    assert jnp.allclose(out, ref, atol=1e-5, rtol=1e-5), "mismatch vs reference (exact)"

    # Case 2: quick GELU, M not a multiple of 8 (exercises the padding path).
    x, w1, b1, w2, b2 = make_inputs(k2, B=1, S=13, dim=32, ff_dim=64)
    out = jax.block_until_ready(
        position_wise_feed_forward(x, w1, b1, w2, b2, gelu_type='quick'))
    ref = _reference(x, w1, b1, w2, b2, 'quick')
    assert out.shape == x.shape
    assert jnp.allclose(out, ref, atol=1e-5, rtol=1e-5), "mismatch vs reference (quick)"

    # Case 3: exact GELU with an explicit FF chunk smaller than ff_dim
    # (exercises the multi-chunk fori_loop accumulation path).
    x, w1, b1, w2, b2 = make_inputs(k3, B=2, S=16, dim=32, ff_dim=256)
    out = jax.block_until_ready(
        position_wise_feed_forward(x, w1, b1, w2, b2, gelu_type='exact', ff_chunk=128))
    ref = _reference(x, w1, b1, w2, b2, 'exact')
    assert out.shape == x.shape
    assert jnp.allclose(out, ref, atol=1e-4, rtol=1e-4), "mismatch vs reference (chunked)"

    print("KERNEL_OK")
</pallas_src>

<mosaic_0001>
module attributes {stable_mosaic.version = 11 : i64} {
  func.func @_ffn_kernel(%arg0: i32, %arg1: memref<8x32xf32, #tpu.memory_space<vmem>>, %arg2: memref<32x64xf32, #tpu.memory_space<vmem>>, %arg3: memref<1x64xf32, #tpu.memory_space<vmem>>, %arg4: memref<64x32xf32, #tpu.memory_space<vmem>>, %arg5: memref<1x32xf32, #tpu.memory_space<vmem>>, %arg6: memref<8x32xf32, #tpu.memory_space<vmem>>) attributes {dimension_semantics = [#tpu.dimension_semantics<parallel>], iteration_bounds = array<i64: 2>, scalar_prefetch = 0 : i64, scratch_operands = 0 : i64, tpu.core_type = #tpu.core_type<tc>, window_params = [{transform_indices = @transform_0, window_bounds = array<i64: 8, 32>}, {pipeline_mode = #tpu.pipeline_mode<synchronous>, transform_indices = @transform_1, window_bounds = array<i64: 32, 64>}, {pipeline_mode = #tpu.pipeline_mode<synchronous>, transform_indices = @transform_2, window_bounds = array<i64: 1, 64>}, {pipeline_mode = #tpu.pipeline_mode<synchronous>, transform_indices = @transform_3, window_bounds = array<i64: 64, 32>}, {pipeline_mode = #tpu.pipeline_mode<synchronous>, transform_indices = @transform_4, window_bounds = array<i64: 1, 32>}, {transform_indices = @transform_5, window_bounds = array<i64: 8, 32>}]} {
    %c0 = arith.constant 0 : index
    %c0_0 = arith.constant 0 : index
    %0 = vector.load %arg1[%c0, %c0_0] : memref<8x32xf32, #tpu.memory_space<vmem>>, vector<8x32xf32>
    %c0_1 = arith.constant 0 : index
    %c0_2 = arith.constant 0 : index
    %1 = vector.load %arg5[%c0_1, %c0_2] : memref<1x32xf32, #tpu.memory_space<vmem>>, vector<1x32xf32>
    %2 = vector.shape_cast %1 : vector<1x32xf32> to vector<1x32xf32>
    %3 = vector.broadcast %2 : vector<1x32xf32> to vector<8x32xf32>
    %c0_3 = arith.constant 0 : index
    %c0_4 = arith.constant 0 : index
    %4 = vector.load %arg2[%c0_3, %c0_4] : memref<32x64xf32, #tpu.memory_space<vmem>>, vector<32x64xf32>
    %cst = arith.constant dense<0.000000e+00> : vector<8x64xf32>
    %5 = tpu.matmul %0, %4, %cst {dimension_numbers = #tpu.dot_dimension_numbers<[1], [0], [0], [1], [0, 0, 1, 1], [], []>} : vector<8x32xf32>, vector<32x64xf32>, vector<8x64xf32> -> vector<8x64xf32>
    %c0_5 = arith.constant 0 : index
    %c0_6 = arith.constant 0 : index
    %6 = vector.load %arg3[%c0_5, %c0_6] : memref<1x64xf32, #tpu.memory_space<vmem>>, vector<1x64xf32>
    %7 = vector.broadcast %6 : vector<1x64xf32> to vector<8x64xf32>
    %8 = arith.addf %5, %7 : vector<8x64xf32>
    %cst_7 = arith.constant 5.000000e-01 : f32
    %9 = vector.broadcast %cst_7 : f32 to vector<8x64xf32>
    %10 = arith.mulf %9, %8 : vector<8x64xf32>
    %cst_8 = arith.constant 0.707106769 : f32
    %11 = vector.broadcast %cst_8 : f32 to vector<8x64xf32>
    %12 = arith.mulf %8, %11 : vector<8x64xf32>
    %13 = math.erf %12 : vector<8x64xf32>
    %cst_9 = arith.constant 1.000000e+00 : f32
    %14 = vector.broadcast %cst_9 : f32 to vector<8x64xf32>
    %15 = arith.addf %14, %13 : vector<8x64xf32>
    %16 = arith.mulf %10, %15 : vector<8x64xf32>
    %c0_10 = arith.constant 0 : index
    %c0_11 = arith.constant 0 : index
    %17 = vector.load %arg4[%c0_10, %c0_11] : memref<64x32xf32, #tpu.memory_space<vmem>>, vector<64x32xf32>
    %cst_12 = arith.constant dense<0.000000e+00> : vector<8x32xf32>
    %18 = tpu.matmul %16, %17, %cst_12 {dimension_numbers = #tpu.dot_dimension_numbers<[1], [0], [0], [1], [0, 0, 1, 1], [], []>} : vector<8x64xf32>, vector<64x32xf32>, vector<8x32xf32> -> vector<8x32xf32>
    %19 = arith.addf %3, %18 : vector<8x32xf32>
    %c0_13 = arith.constant 0 : index
    %c0_14 = arith.constant 0 : index
    %20 = vector.load %arg6[%c0_13, %c0_14] : memref<8x32xf32, #tpu.memory_space<vmem>>, vector<8x32xf32>
    tpu.vector_store %arg6[%c0_13, %c0_14], %19 {strides = array<i32>} : memref<8x32xf32, #tpu.memory_space<vmem>>, vector<8x32xf32>,
    return
  }
  func.func @transform_0(%arg0: i32) -> (i32, i32) {
    %c0_i32 = arith.constant 0 : i32
    %c0_i32_0 = arith.constant 0 : i32
    return %arg0, %c0_i32 : i32, i32
  }
  func.func @transform_1(%arg0: i32) -> (i32, i32) {
    %c0_i32 = arith.constant 0 : i32
    %c0_i32_0 = arith.constant 0 : i32
    %c0_i32_1 = arith.constant 0 : i32
    return %c0_i32, %c0_i32_0 : i32, i32
  }
  func.func @transform_2(%arg0: i32) -> (i32, i32) {
    %c0_i32 = arith.constant 0 : i32
    %c0_i32_0 = arith.constant 0 : i32
    %c0_i32_1 = arith.constant 0 : i32
    return %c0_i32, %c0_i32_0 : i32, i32
  }
  func.func @transform_3(%arg0: i32) -> (i32, i32) {
    %c0_i32 = arith.constant 0 : i32
    %c0_i32_0 = arith.constant 0 : i32
    %c0_i32_1 = arith.constant 0 : i32
    return %c0_i32, %c0_i32_0 : i32, i32
  }
  func.func @transform_4(%arg0: i32) -> (i32, i32) {
    %c0_i32 = arith.constant 0 : i32
    %c0_i32_0 = arith.constant 0 : i32
    %c0_i32_1 = arith.constant 0 : i32
    return %c0_i32, %c0_i32_0 : i32, i32
  }
  func.func @transform_5(%arg0: i32) -> (i32, i32) {
    %c0_i32 = arith.constant 0 : i32
    %c0_i32_0 = arith.constant 0 : i32
    return %arg0, %c0_i32 : i32, i32
  }
}

module attributes {stable_mosaic.version = 11 : i64} {
  func.func @_ffn_kernel(%arg0: i32, %arg1: memref<8x32xf32, #tpu.memory_space<vmem>>, %arg2: memref<32x64xf32, #tpu.memory_space<vmem>>, %arg3: memref<1x64xf32, #tpu.memory_space<vmem>>, %arg4: memref<64x32xf32, #tpu.memory_space<vmem>>, %arg5: memref<1x32xf32, #tpu.memory_space<vmem>>, %arg6: memref<8x32xf32, #tpu.memory_space<vmem>>) attributes {dimension_semantics = [#tpu.dimension_semantics<parallel>], iteration_bounds = array<i64: 2>, scalar_prefetch = 0 : i64, scratch_operands = 0 : i64, tpu.core_type = #tpu.core_type<tc>, window_params = [{transform_indices = @transform_0, window_bounds = array<i64: 8, 32>}, {pipeline_mode = #tpu.pipeline_mode<synchronous>, transform_indices = @transform_1, window_bounds = array<i64: 32, 64>}, {pipeline_mode = #tpu.pipeline_mode<synchronous>, transform_indices = @transform_2, window_bounds = array<i64: 1, 64>}, {pipeline_mode = #tpu.pipeline_mode<synchronous>, transform_indices = @transform_3, window_bounds = array<i64: 64, 32>}, {pipeline_mode = #tpu.pipeline_mode<synchronous>, transform_indices = @transform_4, window_bounds = array<i64: 1, 32>}, {transform_indices = @transform_5, window_bounds = array<i64: 8, 32>}]} {
    %c0 = arith.constant 0 : index
    %c0_0 = arith.constant 0 : index
    %0 = vector.load %arg1[%c0, %c0_0] : memref<8x32xf32, #tpu.memory_space<vmem>>, vector<8x32xf32>
    %c0_1 = arith.constant 0 : index
    %c0_2 = arith.constant 0 : index
    %1 = vector.load %arg5[%c0_1, %c0_2] : memref<1x32xf32, #tpu.memory_space<vmem>>, vector<1x32xf32>
    %2 = vector.shape_cast %1 : vector<1x32xf32> to vector<1x32xf32>
    %3 = vector.broadcast %2 : vector<1x32xf32> to vector<8x32xf32>
    %c0_3 = arith.constant 0 : index
    %c0_4 = arith.constant 0 : index
    %4 = vector.load %arg2[%c0_3, %c0_4] : memref<32x64xf32, #tpu.memory_space<vmem>>, vector<32x64xf32>
    %cst = arith.constant dense<0.000000e+00> : vector<8x64xf32>
    %5 = tpu.matmul %0, %4, %cst {dimension_numbers = #tpu.dot_dimension_numbers<[1], [0], [0], [1], [0, 0, 1, 1], [], []>} : vector<8x32xf32>, vector<32x64xf32>, vector<8x64xf32> -> vector<8x64xf32>
    %c0_5 = arith.constant 0 : index
    %c0_6 = arith.constant 0 : index
    %6 = vector.load %arg3[%c0_5, %c0_6] : memref<1x64xf32, #tpu.memory_space<vmem>>, vector<1x64xf32>
    %7 = vector.broadcast %6 : vector<1x64xf32> to vector<8x64xf32>
    %8 = arith.addf %5, %7 : vector<8x64xf32>
    %cst_7 = arith.constant 5.000000e-01 : f32
    %9 = vector.broadcast %cst_7 : f32 to vector<8x64xf32>
    %10 = arith.mulf %9, %8 : vector<8x64xf32>
    %cst_8 = arith.constant 0.707106769 : f32
    %11 = vector.broadcast %cst_8 : f32 to vector<8x64xf32>
    %12 = arith.mulf %8, %11 : vector<8x64xf32>
    %13 = math.erf %12 : vector<8x64xf32>
    %cst_9 = arith.constant 1.000000e+00 : f32
    %14 = vector.broadcast %cst_9 : f32 to vector<8x64xf32>
    %15 = arith.addf %14, %13 : vector<8x64xf32>
    %16 = arith.mulf %10, %15 : vector<8x64xf32>
    %c0_10 = arith.constant 0 : index
    %c0_11 = arith.constant 0 : index
    %17 = vector.load %arg4[%c0_10, %c0_11] : memref<64x32xf32, #tpu.memory_space<vmem>>, vector<64x32xf32>
    %cst_12 = arith.constant dense<0.000000e+00> : vector<8x32xf32>
    %18 = tpu.matmul %16, %17, %cst_12 {dimension_numbers = #tpu.dot_dimension_numbers<[1], [0], [0], [1], [0, 0, 1, 1], [], []>} : vector<8x64xf32>, vector<64x32xf32>, vector<8x32xf32> -> vector<8x32xf32>
    %19 = arith.addf %3, %18 : vector<8x32xf32>
    %c0_13 = arith.constant 0 : index
    %c0_14 = arith.constant 0 : index
    %20 = vector.load %arg6[%c0_13, %c0_14] : memref<8x32xf32, #tpu.memory_space<vmem>>, vector<8x32xf32>
    tpu.vector_store %arg6[%c0_13, %c0_14], %19 {strides = array<i32>} : memref<8x32xf32, #tpu.memory_space<vmem>>, vector<8x32xf32>,
    return
  }
  func.func @transform_0(%arg0: i32) -> (i32, i32) {
    %c0_i32 = arith.constant 0 : i32
    %c0_i32_0 = arith.constant 0 : i32
    return %arg0, %c0_i32 : i32, i32
  }
  func.func @transform_1(%arg0: i32) -> (i32, i32) {
    %c0_i32 = arith.constant 0 : i32
    %c0_i32_0 = arith.constant 0 : i32
    %c0_i32_1 = arith.constant 0 : i32
    return %c0_i32, %c0_i32_0 : i32, i32
  }
  func.func @transform_2(%arg0: i32) -> (i32, i32) {
    %c0_i32 = arith.constant 0 : i32
    %c0_i32_0 = arith.constant 0 : i32
    %c0_i32_1 = arith.constant 0 : i32
    return %c0_i32, %c0_i32_0 : i32, i32
  }
  func.func @transform_3(%arg0: i32) -> (i32, i32) {
    %c0_i32 = arith.constant 0 : i32
    %c0_i32_0 = arith.constant 0 : i32
    %c0_i32_1 = arith.constant 0 : i32
    return %c0_i32, %c0_i32_0 : i32, i32
  }
  func.func @transform_4(%arg0: i32) -> (i32, i32) {
    %c0_i32 = arith.constant 0 : i32
    %c0_i32_0 = arith.constant 0 : i32
    %c0_i32_1 = arith.constant 0 : i32
    return %c0_i32, %c0_i32_0 : i32, i32
  }
  func.func @transform_5(%arg0: i32) -> (i32, i32) {
    %c0_i32 = arith.constant 0 : i32
    %c0_i32_0 = arith.constant 0 : i32
    return %arg0, %c0_i32 : i32, i32
  }
}

</mosaic_0001>

<llo_original>
// kernel: tpu_custom_call.1
$region0: #{tpu_custom_call.1}
  #allocation0 [shape = 'u32[]', space=smem, size = 0x4, offset = 0x4, fixed_abs, tag = 'smem constant byte address 0x4 - core index']
  #allocation1 [shape = 'u32[72,128]{1,0:T(1,128)}', space=vmem, size = 0x9000, scoped, tag = 'internal scratch']
  %s0 = inlined_call_operand.vmem [shape: f32[16,32], index: 0, kind: input, shape index: {}]
  %s1 = inlined_call_operand.vmem [shape: f32[32,64], index: 1, kind: input, shape index: {}]
  %s2 = inlined_call_operand.vmem [shape: f32[1,64], index: 2, kind: input, shape index: {}]
  %s3 = inlined_call_operand.vmem [shape: f32[64,32], index: 3, kind: input, shape index: {}]
  %s4 = inlined_call_operand.vmem [shape: f32[1,32], index: 4, kind: input, shape index: {}]
  %s5 = inlined_call_operand.hbm [shape: f32[16,32], index: 5, kind: output, shape index: {}]
  %s6 = sld [smem:[#allocation0]]
  $region53: #{tpu_custom_call.1} parent=0
    _
  %s8 = ssub.s32 1, %s6
  %s9 = scalar_select 0, %s8, %s6
  $region1: #{tpu_custom_call.1} parent=0
    #allocation2 [shape = 'u8[8192]{0}', space=vmem, size = 0x2000, scoped, tag = 'output window, operand 0']
    #allocation3 [shape = 's32[2]{0}', space=sflag, size = 0x8, scoped, tag = 'scoped memory for tpu_custom_call.1']
    %10 = vsyncpa [#allocation3], 0
    %s11 = scalar_lea.sflag [#allocation3], 1
    %12 = vsyncpa %s11, 0
    loop: start=0, step=1, limit=4
    $region2: #{tpu_custom_call.1} parent=1 // loop_pre_header
      _
    $region3: #{tpu_custom_call.1} parent=1 // loop_header
      %s14 = sphi 0, %s18
      %p15 = scmp.ge.s32.totalorder %s14, 4
      %s24 = sphi 0, %s26
      %s27 = sphi 0, %s24
      %s28 = sphi 0, %s27
      %s44 = sphi 0, %s28
      %s48 = sphi 0, %s48
      %s50 = sphi 0, %s48
      %s51 = sphi 0, %s50
      %s65 = sphi 0, %s51
      %s69 = sphi 0, %s69
      %s71 = sphi 0, %s69
      %s72 = sphi 0, %s71
      %s86 = sphi 0, %s72
      %s90 = sphi 0, %s90
      %s92 = sphi 0, %s90
      %s93 = sphi 0, %s92
      %s107 = sphi 0, %s93
      %s111 = sphi 0, %s111
      %s113 = sphi 0, %s111
      %s114 = sphi 0, %s113
      %s128 = sphi 0, %s114
      %s134 = sphi 0, %s136
      %s137 = sphi 0, %s134
      %s138 = sphi 0, %s137
      %s154 = sphi 0, %s138
    $region4: #{tpu_custom_call.1} parent=1 // loop_header_branch
      %17 = sbr.rel (%p15) target = $region8
    $region5: #{tpu_custom_call.1} parent=1 // loop_body
      %s19 = ssub.s32 %s14, 1
      %s20 = ssub.s32 %s14, 2
      %s21 = sadd.s32 %s14, 1
      %s22 = ssub.s32 %s14, %s21
      %p23 = scmp.eq.s32.totalorder %s22, 0
      %s25 = sadd.s32 %s24, 1
      %s26 = scalar_select %p23, %s24, %s25
      %p29 = pneg %p23
      %p30 = scmp.eq.s32.totalorder %s14, 1
      %p31 = por %p29, %p30
      %p32 = scmp.ne.s32.totalorder %s24, %s27
      %p33 = scmp.eq.s32.totalorder %s14, 0
      %p34 = por %p32, %p33
      %p35 = scmp.ne.s32.totalorder %s24, %s27
      %p36 = scmp.eq.s32.totalorder %s19, 1
      %p37 = por %p35, %p36
      %p38 = scmp.ne.s32.totalorder %s27, %s28
      %p39 = scmp.eq.s32.totalorder %s19, 0
      %p40 = por %p38, %p39
      %p41 = scmp.ne.s32.totalorder %s27, %s28
      %p42 = scmp.eq.s32.totalorder %s20, 1
      %p43 = por %p41, %p42
      %p45 = scmp.ne.s32.totalorder %s28, %s44
      %p46 = scmp.eq.s32.totalorder %s20, 0
      %p47 = por %p45, %p46
      %s49 = sadd.s32 %s48, 1
      %p52 = scmp.eq.s32.totalorder %s14, 1
      %p53 = scmp.ne.s32.totalorder %s48, %s50
      %p54 = scmp.eq.s32.totalorder %s14, 0
      %p55 = por %p53, %p54
      %p56 = scmp.ne.s32.totalorder %s48, %s50
      %p57 = scmp.eq.s32.totalorder %s19, 1
      %p58 = por %p56, %p57
      %p59 = scmp.ne.s32.totalorder %s50, %s51
      %p60 = scmp.eq.s32.totalorder %s19, 0
      %p61 = por %p59, %p60
      %p62 = scmp.ne.s32.totalorder %s50, %s51
      %p63 = scmp.eq.s32.totalorder %s20, 1
      %p64 = por %p62, %p63
      %p66 = scmp.ne.s32.totalorder %s51, %s65
      %p67 = scmp.eq.s32.totalorder %s20, 0
      %p68 = por %p66, %p67
      %s70 = sadd.s32 %s69, 1
      %p73 = scmp.eq.s32.totalorder %s14, 1
      %p74 = scmp.ne.s32.totalorder %s69, %s71
      %p75 = scmp.eq.s32.totalorder %s14, 0
      %p76 = por %p74, %p75
      %p77 = scmp.ne.s32.totalorder %s69, %s71
      %p78 = scmp.eq.s32.totalorder %s19, 1
      %p79 = por %p77, %p78
      %p80 = scmp.ne.s32.totalorder %s71, %s72
      %p81 = scmp.eq.s32.totalorder %s19, 0
      %p82 = por %p80, %p81
      %p83 = scmp.ne.s32.totalorder %s71, %s72
      %p84 = scmp.eq.s32.totalorder %s20, 1
      %p85 = por %p83, %p84
      %p87 = scmp.ne.s32.totalorder %s72, %s86
      %p88 = scmp.eq.s32.totalorder %s20, 0
      %p89 = por %p87, %p88
      %s91 = sadd.s32 %s90, 1
      %p94 = scmp.eq.s32.totalorder %s14, 1
      %p95 = scmp.ne.s32.totalorder %s90, %s92
      %p96 = scmp.eq.s32.totalorder %s14, 0
      %p97 = por %p95, %p96
      %p98 = scmp.ne.s32.totalorder %s90, %s92
      %p99 = scmp.eq.s32.totalorder %s19, 1
      %p100 = por %p98, %p99
      %p101 = scmp.ne.s32.totalorder %s92, %s93
      %p102 = scmp.eq.s32.totalorder %s19, 0
      %p103 = por %p101, %p102
      %p104 = scmp.ne.s32.totalorder %s92, %s93
      %p105 = scmp.eq.s32.totalorder %s20, 1
      %p106 = por %p104, %p105
      %p108 = scmp.ne.s32.totalorder %s93, %s107
      %p109 = scmp.eq.s32.totalorder %s20, 0
      %p110 = por %p108, %p109
      %s112 = sadd.s32 %s111, 1
      %p115 = scmp.eq.s32.totalorder %s14, 1
      %p116 = scmp.ne.s32.totalorder %s111, %s113
      %p117 = scmp.eq.s32.totalorder %s14, 0
      %p118 = por %p116, %p117
      %p119 = scmp.ne.s32.totalorder %s111, %s113
      %p120 = scmp.eq.s32.totalorder %s19, 1
      %p121 = por %p119, %p120
      %p122 = scmp.ne.s32.totalorder %s113, %s114
      %p123 = scmp.eq.s32.totalorder %s19, 0
      %p124 = por %p122, %p123
      %p125 = scmp.ne.s32.totalorder %s113, %s114
      %p126 = scmp.eq.s32.totalorder %s20, 1
      %p127 = por %p125, %p126
      %p129 = scmp.ne.s32.totalorder %s114, %s128
      %p130 = scmp.eq.s32.totalorder %s20, 0
      %p131 = por %p129, %p130
      %s132 = ssub.s32 %s14, %s21
      %p133 = scmp.eq.s32.totalorder %s132, 0
      %s135 = sadd.s32 %s134, 1
      %s136 = scalar_select %p133, %s134, %s135
      %p139 = pneg %p133
      %p140 = scmp.eq.s32.totalorder %s14, 1
      %p141 = por %p139, %p140
      %p142 = scmp.ne.s32.totalorder %s134, %s137
      %p143 = scmp.eq.s32.totalorder %s14, 0
      %p144 = por %p142, %p143
      %p145 = scmp.ne.s32.totalorder %s134, %s137
      %p146 = scmp.eq.s32.totalorder %s19, 1
      %p147 = por %p145, %p146
      %p148 = scmp.ne.s32.totalorder %s137, %s138
      %p149 = scmp.eq.s32.totalorder %s19, 0
      %p150 = por %p148, %p149
      %p151 = scmp.ne.s32.totalorder %s137, %s138
      %p152 = scmp.eq.s32.totalorder %s20, 1
      %p153 = por %p151, %p152
      %p155 = scmp.ne.s32.totalorder %s138, %s154
      %p156 = scmp.eq.s32.totalorder %s20, 0
      %p157 = por %p155, %p156
      %p158 = scmp.le.s32.totalorder 1, %s14
      %p159 = scmp.lt.s32.totalorder %s14, 3
      %p160 = pnand %p158, %p159
      %p161 = pneg %p160
      // Predicated region
      $region9: #{tpu_custom_call.1} parent=5 // pred_check
        _
      $region10: #{tpu_custom_call.1} parent=5 // pred_check_branch
        %163 = sbr.rel (%p160) target = $region12
      $region11: #{tpu_custom_call.1} parent=5 // pred_region
        %s164 = ssub.s32 %s14, 1
        // Predicated region
        $region13: #{tpu_custom_call.1} parent=11 // pred_check
          %p165 = pneg %p61
        $region14: #{tpu_custom_call.1} parent=11 // pred_check_branch
          %167 = sbr.rel (%p165) target = $region16
        $region15: #{tpu_custom_call.1} parent=11 // pred_region
          _
        $region16: #{tpu_custom_call.1} parent=11 // pred_fallthru
          _
        // Predicated region
        $region17: #{tpu_custom_call.1} parent=11 // pred_check
          %p168 = pneg %p82
        $region18: #{tpu_custom_call.1} parent=11 // pred_check_branch
          %170 = sbr.rel (%p168) target = $region20
        $region19: #{tpu_custom_call.1} parent=11 // pred_region
          _
        $region20: #{tpu_custom_call.1} parent=11 // pred_fallthru
          _
        // Predicated region
        $region21: #{tpu_custom_call.1} parent=11 // pred_check
          %p171 = pneg %p103
        $region22: #{tpu_custom_call.1} parent=11 // pred_check_branch
          %173 = sbr.rel (%p171) target = $region24
        $region23: #{tpu_custom_call.1} parent=11 // pred_region
          _
        $region24: #{tpu_custom_call.1} parent=11 // pred_fallthru
          _
        // Predicated region
        $region25: #{tpu_custom_call.1} parent=11 // pred_check
          %p174 = pneg %p124
        $region26: #{tpu_custom_call.1} parent=11 // pred_check_branch
          %176 = sbr.rel (%p174) target = $region28
        $region27: #{tpu_custom_call.1} parent=11 // pred_region
          _
        $region28: #{tpu_custom_call.1} parent=11 // pred_fallthru
          _
      $region12: #{tpu_custom_call.1} parent=5 // pred_fallthru
        _
      %p177 = scmp.lt.s32.totalorder %s14, 2
      // Predicated region
      $region29: #{tpu_custom_call.1} parent=5 // pred_check
        %p178 = pneg %p177
      $region30: #{tpu_custom_call.1} parent=5 // pred_check_branch
        %180 = sbr.rel (%p178) target = $region32
      $region31: #{tpu_custom_call.1} parent=5 // pred_region
        // Predicated region
        $region33: #{tpu_custom_call.1} parent=31 // pred_check
          %p181 = pneg %p34
        $region34: #{tpu_custom_call.1} parent=31 // pred_check_branch
          %183 = sbr.rel (%p181) target = $region36
        $region35: #{tpu_custom_call.1} parent=31 // pred_region
          %p184 = scmp.lt.s32.totalorder %s14, 1
          %s185 = scalar_select %p184, %s14, 1
          %s186 = smul.addr %s185, 8
          %s187 = scalar_lea.vmem %s0, %s186
        $region36: #{tpu_custom_call.1} parent=31 // pred_fallthru
          _
      $region32: #{tpu_custom_call.1} parent=5 // pred_fallthru
        _
      %p188 = scmp.le.s32.totalorder 1, %s14
      %p189 = scmp.lt.s32.totalorder %s14, 3
      %p190 = pnand %p188, %p189
      %p191 = pneg %p190
      // Predicated region
      $region37: #{tpu_custom_call.1} parent=5 // pred_check
        _
      $region38: #{tpu_custom_call.1} parent=5 // pred_check_branch
        %193 = sbr.rel (%p190) target = $region40
      $region39: #{tpu_custom_call.1} parent=5 // pred_region
        %s194 = ssub.s32 %s14, 1
        %p195 = scmp.lt.s32.totalorder %s19, 1
        %s196 = scalar_select %p195, %s19, 1
        %s197 = smul.addr %s196, 8
        %s198 = scalar_lea.vmem %s0, %s197
        %p199 = pneg %p40
        %p200 = pneg %p37
        %p201 = pneg %p61
        %p202 = pneg %p58
        %p203 = pneg %p82
        %p204 = pneg %p79
        %p205 = pneg %p103
        %p206 = pneg %p100
        %p207 = pneg %p124
        %p208 = pneg %p121
        %p209 = pneg %p150
        %p210 = pneg %p147
        %s211 = sand.u32 %s137, 1
        %s212 = scalar_lea.sflag [#allocation3], %s211
        %s213 = sand.u32 %s137, 1
        %s214 = smul.addr %s213, 8
        %s215 = scalar_lea.vmem [#allocation2], %s214
        %p216 = scmp.lt.s32.totalorder %s19, 1
        %s217 = scalar_select %p216, %s19, 1
        %s218 = smul.addr %s217, 8
        %s219 = scalar_lea.vmem %s0, %s218
        %v220 = vld [vmem:[%s219] sm:$0xff]
        %v221 = vld [vmem:[%s4] sm:$0x1]
        %v223 = vperm.slane %v221, 0
        %v225 = vld [vmem:[%s1] sm:$0xff]
        %v226 = vld [vmem:[%s1 + $0x8] sm:$0xff]
        %v227 = vld [vmem:[%s1 + $0x10] sm:$0xff]
        %v228 = vld [vmem:[%s1 + $0x18] sm:$0xff]
        %v229 = vld [vmem:[%s2] sm:$0x1]
        %v231 = vperm.slane %v229, 0
        %vm233 = vcmask 261120
        %v235 = vsel %vm233, %v220, 0
        %237 = vmatpush.msra.mxu0 0.0
        %238 = vmatpush.msra.mxu0 0.0
        %239 = vmatpush.msra.mxu0 0.0
        %240 = vmatpush.msra.mxu0 0.0
        %241 = vmatpush.msra.mxu0 0.0
        %242 = vmatpush.msra.mxu0 0.0
        %243 = vmatpush.msra.mxu0 0.0
        %244 = vmatpush.msra.mxu0 0.0
        %245 = vmatpush.msra.mxu0 0.0
        %246 = vmatpush.msra.mxu0 0.0
        %247 = vmatpush.msra.mxu0 0.0
        %248 = vmatpush.msra.mxu0 0.0
        %249 = vmatpush.msra.mxu0 %v228
        %250 = vmatpush.msra.mxu0 %v227
        %251 = vmatpush.msra.mxu0 %v226
        %252 = vmatpush.msra.mxu0 %v225
        %253 = vmatmul.f32.gmra.mxu0 %v235
        %v254 = vpop.f32.mrf.mxu0
        %v255 = vadd.f32 %v231, %v254
        %256 = vdwg.mxu0
        %v257 = vmul.f32 %v255, 0.5
        %v258 = vmul.f32 %v255, 0.70710677
        %v259 = vmul.f32 %v258, %v258
        %v260 = vmin.f32 16.0, %v259
        %v261 = vmul.f32 %v260, 2.1237322e-06
        %v262 = vadd.f32 %v261, 0.00028619796
        %v263 = vmul.f32 %v260, %v262
        %v264 = vadd.f32 %v263, 0.0036580483
        %v265 = vmul.f32 %v260, %v264
        %v266 = vadd.f32 %v265, 0.05243302
        %v267 = vmul.f32 %v260, %v266
        %v268 = vadd.f32 %v267, 0.18741608
        %v269 = vmul.f32 %v260, %v268
        %v270 = vadd.f32 %v269, 1.1283791
        %v271 = vmul.f32 %v258, %v270
        %v272 = vmul.f32 %v260, 3.8918573e-05
        %v273 = vadd.f32 %v272, 0.001143296
        %v274 = vmul.f32 %v260, %v273
        %v275 = vadd.f32 %v274, 0.014752088
        %v276 = vmul.f32 %v260, %v275
        %v277 = vadd.f32 %v276, 0.112945676
        %v278 = vmul.f32 %v260, %v277
        %v279 = vadd.f32 %v278, 0.4994258
        %v280 = vmul.f32 %v260, %v279
        %v281 = vadd.f32 %v280, 1.0
        %v282 = vrcp.pop %v281
        %v283 = vmul.f32 %v281, %v282
        %v284 = vsub.f32 1.0, %v283
        %v285 = vmul.f32 %v282, %v284
        %v286 = vadd.f32 %v282, %v285
        %vm287 = vweird.f32 %v281
        %vm288 = vweird.f32 %v282
        %vm289 = vmor %vm287, %vm288
        %v290 = vsel %vm289, %v282, %v286
        %v291 = vand.u32 2147483647, %v281
        %vm292 = vcmp.eq.f32.partialorder %v291, 8.507059e+37
        %v293 = vand.u32 %v281, 2147483648
        %v294 = vor.u32 1.1754944e-38, %v293
        %v295 = vsel %vm292, %v294, %v290
        %v296 = vmul.f32 %v271, %v295
        %v297 = vmin.f32 %v296, 1.0
        %v298 = vmax.f32 %v297, -1.0
        %v299 = vadd.f32 %v298, 1.0
        %v300 = vmul.f32 %v257, %v299
        %v301 = vld [vmem:[%s3] sm:$0xff]
        %v302 = vld [vmem:[%s3 + $0x8] sm:$0xff]
        %v303 = vld [vmem:[%s3 + $0x10] sm:$0xff]
        %v304 = vld [vmem:[%s3 + $0x18] sm:$0xff]
        %v305 = vld [vmem:[%s3 + $0x20] sm:$0xff]
        %v306 = vld [vmem:[%s3 + $0x28] sm:$0xff]
        %v307 = vld [vmem:[%s3 + $0x30] sm:$0xff]
        %v308 = vld [vmem:[%s3 + $0x38] sm:$0xff]
        %vm309 = vcmask 523264
        %v311 = vsel %vm309, %v300, 0
        %313 = vmatpush.msra.mxu0 0.0
        %314 = vmatpush.msra.mxu0 0.0
        %315 = vmatpush.msra.mxu0 0.0
        %316 = vmatpush.msra.mxu0 0.0
        %317 = vmatpush.msra.mxu0 0.0
        %318 = vmatpush.msra.mxu0 0.0
        %319 = vmatpush.msra.mxu0 0.0
        %320 = vmatpush.msra.mxu0 0.0
        %321 = vmatpush.msra.mxu0 %v308
        %322 = vmatpush.msra.mxu0 %v307
        %323 = vmatpush.msra.mxu0 %v306
        %324 = vmatpush.msra.mxu0 %v305
        %325 = vmatpush.msra.mxu0 %v304
        %326 = vmatpush.msra.mxu0 %v303
        %327 = vmatpush.msra.mxu0 %v302
        %328 = vmatpush.msra.mxu0 %v301
        %329 = vmatmul.f32.gmra.mxu0 %v311
        %v330 = vpop.f32.mrf.mxu0
        %v331 = vadd.f32 0.0, %v330
        %332 = vdwg.mxu0
        %v333 = vadd.f32 %v223, %v331
        %334 = vst.msk [vmem:[%s215] sm:$0xff] %vm233, %v333
        %s335 = sand.u32 %s137, 1
        %s336 = scalar_lea.sflag [#allocation3], %s335
        %s337 = sand.u32 %s137, 1
        %s338 = smul.addr %s337, 8
        %s339 = scalar_lea.vmem [#allocation2], %s338
        // Predicated region
        $region41: #{tpu_custom_call.1} parent=39 // pred_check
          %p340 = pneg %p147
        $region42: #{tpu_custom_call.1} parent=39 // pred_check_branch
          %342 = sbr.rel (%p340) target = $region44
        $region43: #{tpu_custom_call.1} parent=39 // pred_region
          %344 = vsyncadd %s336, 0
          %s345 = smul.addr %s19, 8
          %s346 = scalar_lea.hbm %s5, %s345
          %s348 = sshll.u32 %s339, 4
          %s349 = int_to_ptr.vmem [resolvable:$true] %s348
          %s350 = sshll.u32 %s346, 4
          %s351 = int_to_ptr.hbm [resolvable:$true] %s350
          %353 = dma.vmem_to_hbm [thread:$0]  %s349, 128, %s351, %s336
        $region44: #{tpu_custom_call.1} parent=39 // pred_fallthru
          _
      $region40: #{tpu_custom_call.1} parent=5 // pred_fallthru
        _
      %p354 = scmp.le.s32.totalorder 2, %s14
      // Predicated region
      $region45: #{tpu_custom_call.1} parent=5 // pred_check
        %p355 = pneg %p354
      $region46: #{tpu_custom_call.1} parent=5 // pred_check_branch
        %357 = sbr.rel (%p355) target = $region48
      $region47: #{tpu_custom_call.1} parent=5 // pred_region
        %s358 = ssub.s32 %s14, 2
        // Predicated region
        $region49: #{tpu_custom_call.1} parent=47 // pred_check
          %p359 = pneg %p153
        $region50: #{tpu_custom_call.1} parent=47 // pred_check_branch
          %361 = sbr.rel (%p359) target = $region52
        $region51: #{tpu_custom_call.1} parent=47 // pred_region
          %s362 = sand.u32 %s138, 1
          %s363 = scalar_lea.sflag [#allocation3], %s362
          %s364 = sand.u32 %s138, 1
          %s365 = smul.addr %s364, 8
          %s366 = scalar_lea.vmem [#allocation2], %s365
          %368 = dma.done %s363, 128
        $region52: #{tpu_custom_call.1} parent=47 // pred_fallthru
          _
      $region48: #{tpu_custom_call.1} parent=5 // pred_fallthru
        _
    $region6: #{tpu_custom_call.1} parent=1 // loop_footer
      %s18 = sadd.s32 1, %s14
    $region7: #{tpu_custom_call.1} parent=1 // loop_footer_branch
      %13 = sbr.rel target = $region3
    $region8: #{tpu_custom_call.1} parent=1 // loop_exit
      _
    %369 = vsyncpa [#allocation3], 1
    %s370 = scalar_lea.sflag [#allocation3], 1
    %371 = vsyncpa %s370, 1

// kernel: tpu_custom_call.1
$region0: #{tpu_custom_call.1}
  #allocation0 [shape = 'u32[]', space=smem, size = 0x4, offset = 0x4, fixed_abs, tag = 'smem constant byte address 0x4 - core index']
  #allocation1 [shape = 'u32[72,128]{1,0:T(1,128)}', space=vmem, size = 0x9000, scoped, tag = 'internal scratch']
  %s0 = inlined_call_operand.vmem [shape: f32[16,32], index: 0, kind: input, shape index: {}]
  %s1 = inlined_call_operand.vmem [shape: f32[32,64], index: 1, kind: input, shape index: {}]
  %s2 = inlined_call_operand.vmem [shape: f32[1,64], index: 2, kind: input, shape index: {}]
  %s3 = inlined_call_operand.vmem [shape: f32[64,32], index: 3, kind: input, shape index: {}]
  %s4 = inlined_call_operand.vmem [shape: f32[1,32], index: 4, kind: input, shape index: {}]
  %s5 = inlined_call_operand.hbm [shape: f32[16,32], index: 5, kind: output, shape index: {}]
  %s6 = sld [smem:[#allocation0]]
  $region53: #{tpu_custom_call.1} parent=0
    _
  %s8 = ssub.s32 1, %s6
  %s9 = scalar_select 0, %s8, %s6
  $region1: #{tpu_custom_call.1} parent=0
    #allocation2 [shape = 'u8[8192]{0}', space=vmem, size = 0x2000, scoped, tag = 'output window, operand 0']
    #allocation3 [shape = 's32[2]{0}', space=sflag, size = 0x8, scoped, tag = 'scoped memory for tpu_custom_call.1']
    %10 = vsyncpa [#allocation3], 0
    %s11 = scalar_lea.sflag [#allocation3], 1
    %12 = vsyncpa %s11, 0
    loop: start=0, step=1, limit=4
    $region2: #{tpu_custom_call.1} parent=1 // loop_pre_header
      _
    $region3: #{tpu_custom_call.1} parent=1 // loop_header
      %s14 = sphi 0, %s18
      %p15 = scmp.ge.s32.totalorder %s14, 4
      %s24 = sphi 0, %s26
      %s27 = sphi 0, %s24
      %s28 = sphi 0, %s27
      %s44 = sphi 0, %s28
      %s48 = sphi 0, %s48
      %s50 = sphi 0, %s48
      %s51 = sphi 0, %s50
      %s65 = sphi 0, %s51
      %s69 = sphi 0, %s69
      %s71 = sphi 0, %s69
      %s72 = sphi 0, %s71
      %s86 = sphi 0, %s72
      %s90 = sphi 0, %s90
      %s92 = sphi 0, %s90
      %s93 = sphi 0, %s92
      %s107 = sphi 0, %s93
      %s111 = sphi 0, %s111
      %s113 = sphi 0, %s111
      %s114 = sphi 0, %s113
      %s128 = sphi 0, %s114
      %s134 = sphi 0, %s136
      %s137 = sphi 0, %s134
      %s138 = sphi 0, %s137
      %s154 = sphi 0, %s138
    $region4: #{tpu_custom_call.1} parent=1 // loop_header_branch
      %17 = sbr.rel (%p15) target = $region8
    $region5: #{tpu_custom_call.1} parent=1 // loop_body
      %s19 = ssub.s32 %s14, 1
      %s20 = ssub.s32 %s14, 2
      %s21 = sadd.s32 %s14, 1
      %s22 = ssub.s32 %s14, %s21
      %p23 = scmp.eq.s32.totalorder %s22, 0
      %s25 = sadd.s32 %s24, 1
      %s26 = scalar_select %p23, %s24, %s25
      %p29 = pneg %p23
      %p30 = scmp.eq.s32.totalorder %s14, 1
      %p31 = por %p29, %p30
      %p32 = scmp.ne.s32.totalorder %s24, %s27
      %p33 = scmp.eq.s32.totalorder %s14, 0
      %p34 = por %p32, %p33
      %p35 = scmp.ne.s32.totalorder %s24, %s27
      %p36 = scmp.eq.s32.totalorder %s19, 1
      %p37 = por %p35, %p36
      %p38 = scmp.ne.s32.totalorder %s27, %s28
      %p39 = scmp.eq.s32.totalorder %s19, 0
      %p40 = por %p38, %p39
      %p41 = scmp.ne.s32.totalorder %s27, %s28
      %p42 = scmp.eq.s32.totalorder %s20, 1
      %p43 = por %p41, %p42
      %p45 = scmp.ne.s32.totalorder %s28, %s44
      %p46 = scmp.eq.s32.totalorder %s20, 0
      %p47 = por %p45, %p46
      %s49 = sadd.s32 %s48, 1
      %p52 = scmp.eq.s32.totalorder %s14, 1
      %p53 = scmp.ne.s32.totalorder %s48, %s50
      %p54 = scmp.eq.s32.totalorder %s14, 0
      %p55 = por %p53, %p54
      %p56 = scmp.ne.s32.totalorder %s48, %s50
      %p57 = scmp.eq.s32.totalorder %s19, 1
      %p58 = por %p56, %p57
      %p59 = scmp.ne.s32.totalorder %s50, %s51
      %p60 = scmp.eq.s32.totalorder %s19, 0
      %p61 = por %p59, %p60
      %p62 = scmp.ne.s32.totalorder %s50, %s51
      %p63 = scmp.eq.s32.totalorder %s20, 1
      %p64 = por %p62, %p63
      %p66 = scmp.ne.s32.totalorder %s51, %s65
      %p67 = scmp.eq.s32.totalorder %s20, 0
      %p68 = por %p66, %p67
      %s70 = sadd.s32 %s69, 1
      %p73 = scmp.eq.s32.totalorder %s14, 1
      %p74 = scmp.ne.s32.totalorder %s69, %s71
      %p75 = scmp.eq.s32.totalorder %s14, 0
      %p76 = por %p74, %p75
      %p77 = scmp.ne.s32.totalorder %s69, %s71
      %p78 = scmp.eq.s32.totalorder %s19, 1
      %p79 = por %p77, %p78
      %p80 = scmp.ne.s32.totalorder %s71, %s72
      %p81 = scmp.eq.s32.totalorder %s19, 0
      %p82 = por %p80, %p81
      %p83 = scmp.ne.s32.totalorder %s71, %s72
      %p84 = scmp.eq.s32.totalorder %s20, 1
      %p85 = por %p83, %p84
      %p87 = scmp.ne.s32.totalorder %s72, %s86
      %p88 = scmp.eq.s32.totalorder %s20, 0
      %p89 = por %p87, %p88
      %s91 = sadd.s32 %s90, 1
      %p94 = scmp.eq.s32.totalorder %s14, 1
      %p95 = scmp.ne.s32.totalorder %s90, %s92
      %p96 = scmp.eq.s32.totalorder %s14, 0
      %p97 = por %p95, %p96
      %p98 = scmp.ne.s32.totalorder %s90, %s92
      %p99 = scmp.eq.s32.totalorder %s19, 1
      %p100 = por %p98, %p99
      %p101 = scmp.ne.s32.totalorder %s92, %s93
      %p102 = scmp.eq.s32.totalorder %s19, 0
      %p103 = por %p101, %p102
      %p104 = scmp.ne.s32.totalorder %s92, %s93
      %p105 = scmp.eq.s32.totalorder %s20, 1
      %p106 = por %p104, %p105
      %p108 = scmp.ne.s32.totalorder %s93, %s107
      %p109 = scmp.eq.s32.totalorder %s20, 0
      %p110 = por %p108, %p109
      %s112 = sadd.s32 %s111, 1
      %p115 = scmp.eq.s32.totalorder %s14, 1
      %p116 = scmp.ne.s32.totalorder %s111, %s113
      %p117 = scmp.eq.s32.totalorder %s14, 0
      %p118 = por %p116, %p117
      %p119 = scmp.ne.s32.totalorder %s111, %s113
      %p120 = scmp.eq.s32.totalorder %s19, 1
      %p121 = por %p119, %p120
      %p122 = scmp.ne.s32.totalorder %s113, %s114
      %p123 = scmp.eq.s32.totalorder %s19, 0
      %p124 = por %p122, %p123
      %p125 = scmp.ne.s32.totalorder %s113, %s114
      %p126 = scmp.eq.s32.totalorder %s20, 1
      %p127 = por %p125, %p126
      %p129 = scmp.ne.s32.totalorder %s114, %s128
      %p130 = scmp.eq.s32.totalorder %s20, 0
      %p131 = por %p129, %p130
      %s132 = ssub.s32 %s14, %s21
      %p133 = scmp.eq.s32.totalorder %s132, 0
      %s135 = sadd.s32 %s134, 1
      %s136 = scalar_select %p133, %s134, %s135
      %p139 = pneg %p133
      %p140 = scmp.eq.s32.totalorder %s14, 1
      %p141 = por %p139, %p140
      %p142 = scmp.ne.s32.totalorder %s134, %s137
      %p143 = scmp.eq.s32.totalorder %s14, 0
      %p144 = por %p142, %p143
      %p145 = scmp.ne.s32.totalorder %s134, %s137
      %p146 = scmp.eq.s32.totalorder %s19, 1
      %p147 = por %p145, %p146
      %p148 = scmp.ne.s32.totalorder %s137, %s138
      %p149 = scmp.eq.s32.totalorder %s19, 0
      %p150 = por %p148, %p149
      %p151 = scmp.ne.s32.totalorder %s137, %s138
      %p152 = scmp.eq.s32.totalorder %s20, 1
      %p153 = por %p151, %p152
      %p155 = scmp.ne.s32.totalorder %s138, %s154
      %p156 = scmp.eq.s32.totalorder %s20, 0
      %p157 = por %p155, %p156
      %p158 = scmp.le.s32.totalorder 1, %s14
      %p159 = scmp.lt.s32.totalorder %s14, 3
      %p160 = pnand %p158, %p159
      %p161 = pneg %p160
      // Predicated region
      $region9: #{tpu_custom_call.1} parent=5 // pred_check
        _
      $region10: #{tpu_custom_call.1} parent=5 // pred_check_branch
        %163 = sbr.rel (%p160) target = $region12
      $region11: #{tpu_custom_call.1} parent=5 // pred_region
        %s164 = ssub.s32 %s14, 1
        // Predicated region
        $region13: #{tpu_custom_call.1} parent=11 // pred_check
          %p165 = pneg %p61
        $region14: #{tpu_custom_call.1} parent=11 // pred_check_branch
          %167 = sbr.rel (%p165) target = $region16
        $region15: #{tpu_custom_call.1} parent=11 // pred_region
          _
        $region16: #{tpu_custom_call.1} parent=11 // pred_fallthru
          _
        // Predicated region
        $region17: #{tpu_custom_call.1} parent=11 // pred_check
          %p168 = pneg %p82
        $region18: #{tpu_custom_call.1} parent=11 // pred_check_branch
          %170 = sbr.rel (%p168) target = $region20
        $region19: #{tpu_custom_call.1} parent=11 // pred_region
          _
        $region20: #{tpu_custom_call.1} parent=11 // pred_fallthru
          _
        // Predicated region
        $region21: #{tpu_custom_call.1} parent=11 // pred_check
          %p171 = pneg %p103
        $region22: #{tpu_custom_call.1} parent=11 // pred_check_branch
          %173 = sbr.rel (%p171) target = $region24
        $region23: #{tpu_custom_call.1} parent=11 // pred_region
          _
        $region24: #{tpu_custom_call.1} parent=11 // pred_fallthru
          _
        // Predicated region
        $region25: #{tpu_custom_call.1} parent=11 // pred_check
          %p174 = pneg %p124
        $region26: #{tpu_custom_call.1} parent=11 // pred_check_branch
          %176 = sbr.rel (%p174) target = $region28
        $region27: #{tpu_custom_call.1} parent=11 // pred_region
          _
        $region28: #{tpu_custom_call.1} parent=11 // pred_fallthru
          _
      $region12: #{tpu_custom_call.1} parent=5 // pred_fallthru
        _
      %p177 = scmp.lt.s32.totalorder %s14, 2
      // Predicated region
      $region29: #{tpu_custom_call.1} parent=5 // pred_check
        %p178 = pneg %p177
      $region30: #{tpu_custom_call.1} parent=5 // pred_check_branch
        %180 = sbr.rel (%p178) target = $region32
      $region31: #{tpu_custom_call.1} parent=5 // pred_region
        // Predicated region
        $region33: #{tpu_custom_call.1} parent=31 // pred_check
          %p181 = pneg %p34
        $region34: #{tpu_custom_call.1} parent=31 // pred_check_branch
          %183 = sbr.rel (%p181) target = $region36
        $region35: #{tpu_custom_call.1} parent=31 // pred_region
          %p184 = scmp.lt.s32.totalorder %s14, 1
          %s185 = scalar_select %p184, %s14, 1
          %s186 = smul.addr %s185, 8
          %s187 = scalar_lea.vmem %s0, %s186
        $region36: #{tpu_custom_call.1} parent=31 // pred_fallthru
          _
      $region32: #{tpu_custom_call.1} parent=5 // pred_fallthru
        _
      %p188 = scmp.le.s32.totalorder 1, %s14
      %p189 = scmp.lt.s32.totalorder %s14, 3
      %p190 = pnand %p188, %p189
      %p191 = pneg %p190
      // Predicated region
      $region37: #{tpu_custom_call.1} parent=5 // pred_check
        _
      $region38: #{tpu_custom_call.1} parent=5 // pred_check_branch
        %193 = sbr.rel (%p190) target = $region40
      $region39: #{tpu_custom_call.1} parent=5 // pred_region
        %s194 = ssub.s32 %s14, 1
        %p195 = scmp.lt.s32.totalorder %s19, 1
        %s196 = scalar_select %p195, %s19, 1
        %s197 = smul.addr %s196, 8
        %s198 = scalar_lea.vmem %s0, %s197
        %p199 = pneg %p40
        %p200 = pneg %p37
        %p201 = pneg %p61
        %p202 = pneg %p58
        %p203 = pneg %p82
        %p204 = pneg %p79
        %p205 = pneg %p103
        %p206 = pneg %p100
        %p207 = pneg %p124
        %p208 = pneg %p121
        %p209 = pneg %p150
        %p210 = pneg %p147
        %s211 = sand.u32 %s137, 1
        %s212 = scalar_lea.sflag [#allocation3], %s211
        %s213 = sand.u32 %s137, 1
        %s214 = smul.addr %s213, 8
        %s215 = scalar_lea.vmem [#allocation2], %s214
        %p216 = scmp.lt.s32.totalorder %s19, 1
        %s217 = scalar_select %p216, %s19, 1
        %s218 = smul.addr %s217, 8
        %s219 = scalar_lea.vmem %s0, %s218
        %v220 = vld [vmem:[%s219] sm:$0xff]
        %v221 = vld [vmem:[%s4] sm:$0x1]
        %v223 = vperm.slane %v221, 0
        %v225 = vld [vmem:[%s1] sm:$0xff]
        %v226 = vld [vmem:[%s1 + $0x8] sm:$0xff]
        %v227 = vld [vmem:[%s1 + $0x10] sm:$0xff]
        %v228 = vld [vmem:[%s1 + $0x18] sm:$0xff]
        %v229 = vld [vmem:[%s2] sm:$0x1]
        %v231 = vperm.slane %v229, 0
        %vm233 = vcmask 261120
        %v235 = vsel %vm233, %v220, 0
        %237 = vmatpush.msra.mxu0 0.0
        %238 = vmatpush.msra.mxu0 0.0
        %239 = vmatpush.msra.mxu0 0.0
        %240 = vmatpush.msra.mxu0 0.0
        %241 = vmatpush.msra.mxu0 0.0
        %242 = vmatpush.msra.mxu0 0.0
        %243 = vmatpush.msra.mxu0 0.0
        %244 = vmatpush.msra.mxu0 0.0
        %245 = vmatpush.msra.mxu0 0.0
        %246 = vmatpush.msra.mxu0 0.0
        %247 = vmatpush.msra.mxu0 0.0
        %248 = vmatpush.msra.mxu0 0.0
        %249 = vmatpush.msra.mxu0 %v228
        %250 = vmatpush.msra.mxu0 %v227
        %251 = vmatpush.msra.mxu0 %v226
        %252 = vmatpush.msra.mxu0 %v225
        %253 = vmatmul.f32.gmra.mxu0 %v235
        %v254 = vpop.f32.mrf.mxu0
        %v255 = vadd.f32 %v231, %v254
        %256 = vdwg.mxu0
        %v257 = vmul.f32 %v255, 0.5
        %v258 = vmul.f32 %v255, 0.70710677
        %v259 = vmul.f32 %v258, %v258
        %v260 = vmin.f32 16.0, %v259
        %v261 = vmul.f32 %v260, 2.1237322e-06
        %v262 = vadd.f32 %v261, 0.00028619796
        %v263 = vmul.f32 %v260, %v262
        %v264 = vadd.f32 %v263, 0.0036580483
        %v265 = vmul.f32 %v260, %v264
        %v266 = vadd.f32 %v265, 0.05243302
        %v267 = vmul.f32 %v260, %v266
        %v268 = vadd.f32 %v267, 0.18741608
        %v269 = vmul.f32 %v260, %v268
        %v270 = vadd.f32 %v269, 1.1283791
        %v271 = vmul.f32 %v258, %v270
        %v272 = vmul.f32 %v260, 3.8918573e-05
        %v273 = vadd.f32 %v272, 0.001143296
        %v274 = vmul.f32 %v260, %v273
        %v275 = vadd.f32 %v274, 0.014752088
        %v276 = vmul.f32 %v260, %v275
        %v277 = vadd.f32 %v276, 0.112945676
        %v278 = vmul.f32 %v260, %v277
        %v279 = vadd.f32 %v278, 0.4994258
        %v280 = vmul.f32 %v260, %v279
        %v281 = vadd.f32 %v280, 1.0
        %v282 = vrcp.pop %v281
        %v283 = vmul.f32 %v281, %v282
        %v284 = vsub.f32 1.0, %v283
        %v285 = vmul.f32 %v282, %v284
        %v286 = vadd.f32 %v282, %v285
        %vm287 = vweird.f32 %v281
        %vm288 = vweird.f32 %v282
        %vm289 = vmor %vm287, %vm288
        %v290 = vsel %vm289, %v282, %v286
        %v291 = vand.u32 2147483647, %v281
        %vm292 = vcmp.eq.f32.partialorder %v291, 8.507059e+37
        %v293 = vand.u32 %v281, 2147483648
        %v294 = vor.u32 1.1754944e-38, %v293
        %v295 = vsel %vm292, %v294, %v290
        %v296 = vmul.f32 %v271, %v295
        %v297 = vmin.f32 %v296, 1.0
        %v298 = vmax.f32 %v297, -1.0
        %v299 = vadd.f32 %v298, 1.0
        %v300 = vmul.f32 %v257, %v299
        %v301 = vld [vmem:[%s3] sm:$0xff]
        %v302 = vld [vmem:[%s3 + $0x8] sm:$0xff]
        %v303 = vld [vmem:[%s3 + $0x10] sm:$0xff]
        %v304 = vld [vmem:[%s3 + $0x18] sm:$0xff]
        %v305 = vld [vmem:[%s3 + $0x20] sm:$0xff]
        %v306 = vld [vmem:[%s3 + $0x28] sm:$0xff]
        %v307 = vld [vmem:[%s3 + $0x30] sm:$0xff]
        %v308 = vld [vmem:[%s3 + $0x38] sm:$0xff]
        %vm309 = vcmask 523264
        %v311 = vsel %vm309, %v300, 0
        %313 = vmatpush.msra.mxu0 0.0
        %314 = vmatpush.msra.mxu0 0.0
        %315 = vmatpush.msra.mxu0 0.0
        %316 = vmatpush.msra.mxu0 0.0
        %317 = vmatpush.msra.mxu0 0.0
        %318 = vmatpush.msra.mxu0 0.0
        %319 = vmatpush.msra.mxu0 0.0
        %320 = vmatpush.msra.mxu0 0.0
        %321 = vmatpush.msra.mxu0 %v308
        %322 = vmatpush.msra.mxu0 %v307
        %323 = vmatpush.msra.mxu0 %v306
        %324 = vmatpush.msra.mxu0 %v305
        %325 = vmatpush.msra.mxu0 %v304
        %326 = vmatpush.msra.mxu0 %v303
        %327 = vmatpush.msra.mxu0 %v302
        %328 = vmatpush.msra.mxu0 %v301
        %329 = vmatmul.f32.gmra.mxu0 %v311
        %v330 = vpop.f32.mrf.mxu0
        %v331 = vadd.f32 0.0, %v330
        %332 = vdwg.mxu0
        %v333 = vadd.f32 %v223, %v331
        %334 = vst.msk [vmem:[%s215] sm:$0xff] %vm233, %v333
        %s335 = sand.u32 %s137, 1
        %s336 = scalar_lea.sflag [#allocation3], %s335
        %s337 = sand.u32 %s137, 1
        %s338 = smul.addr %s337, 8
        %s339 = scalar_lea.vmem [#allocation2], %s338
        // Predicated region
        $region41: #{tpu_custom_call.1} parent=39 // pred_check
          %p340 = pneg %p147
        $region42: #{tpu_custom_call.1} parent=39 // pred_check_branch
          %342 = sbr.rel (%p340) target = $region44
        $region43: #{tpu_custom_call.1} parent=39 // pred_region
          %344 = vsyncadd %s336, 0
          %s345 = smul.addr %s19, 8
          %s346 = scalar_lea.hbm %s5, %s345
          %s348 = sshll.u32 %s339, 4
          %s349 = int_to_ptr.vmem [resolvable:$true] %s348
          %s350 = sshll.u32 %s346, 4
          %s351 = int_to_ptr.hbm [resolvable:$true] %s350
          %353 = dma.vmem_to_hbm [thread:$0]  %s349, 128, %s351, %s336
        $region44: #{tpu_custom_call.1} parent=39 // pred_fallthru
          _
      $region40: #{tpu_custom_call.1} parent=5 // pred_fallthru
        _
      %p354 = scmp.le.s32.totalorder 2, %s14
      // Predicated region
      $region45: #{tpu_custom_call.1} parent=5 // pred_check
        %p355 = pneg %p354
      $region46: #{tpu_custom_call.1} parent=5 // pred_check_branch
        %357 = sbr.rel (%p355) target = $region48
      $region47: #{tpu_custom_call.1} parent=5 // pred_region
        %s358 = ssub.s32 %s14, 2
        // Predicated region
        $region49: #{tpu_custom_call.1} parent=47 // pred_check
          %p359 = pneg %p153
        $region50: #{tpu_custom_call.1} parent=47 // pred_check_branch
          %361 = sbr.rel (%p359) target = $region52
        $region51: #{tpu_custom_call.1} parent=47 // pred_region
          %s362 = sand.u32 %s138, 1
          %s363 = scalar_lea.sflag [#allocation3], %s362
          %s364 = sand.u32 %s138, 1
          %s365 = smul.addr %s364, 8
          %s366 = scalar_lea.vmem [#allocation2], %s365
          %368 = dma.done %s363, 128
        $region52: #{tpu_custom_call.1} parent=47 // pred_fallthru
          _
      $region48: #{tpu_custom_call.1} parent=5 // pred_fallthru
        _
    $region6: #{tpu_custom_call.1} parent=1 // loop_footer
      %s18 = sadd.s32 1, %s14
    $region7: #{tpu_custom_call.1} parent=1 // loop_footer_branch
      %13 = sbr.rel target = $region3
    $region8: #{tpu_custom_call.1} parent=1 // loop_exit
      _
    %369 = vsyncpa [#allocation3], 1
    %s370 = scalar_lea.sflag [#allocation3], 1
    %371 = vsyncpa %s370, 1

</llo_original>
